<compile_context>
chip_gen: v5e
topology: v5e:2x2
jax: 0.10.0
libtpu: 0.0.40
codegen_flags: <defaults>
</compile_context>

<pallas_src>
import jax
import jax.numpy as jnp
from jax import lax
from jax.experimental import pallas as pl
from jax.experimental.pallas import tpu as pltpu

n_embd = 32


def _round_up(x, m):
    return (x + m - 1) // m * m


def _ffn_kernel(x_ref, w_ref, b_ref, o_ref):
    # x_ref: (TM, C_in)   w_ref: (C_out, C_in)  (PyTorch layout, VMEM-resident)
    # b_ref: (1, C_out)   o_ref: (TM, C_out)
    # y = x @ W^T  (contract x axis 1 with w axis 1) with f32 accumulation.
    y = lax.dot_general(
        x_ref[...], w_ref[...],
        dimension_numbers=(((1,), (1,)), ((), ())),
        preferred_element_type=jnp.float32,
    )
    y = y + b_ref[...].astype(jnp.float32)     # broadcast bias over rows
    o_ref[...] = jnp.maximum(y, 0.0).astype(o_ref.dtype)


def feed_forward(x, weight, bias, *, block_m=1024):
    """x: (B, T, C). weight: (C_out, C_in) PyTorch convention. bias: (C_out,)."""
    B, T, C = x.shape
    C_out, C_in = weight.shape
    assert C_in == C, "weight fan-in must match n_embd"

    M = B * T
    x2d = x.reshape(M, C)
    b2d = bias.reshape(1, C_out)

    # Row tile: large (amortizes per-grid-step overhead, ~memory-bound op),
    # multiple of 8 (f32 sublane). Pad M so the grid divides evenly.
    tm = min(block_m, _round_up(M, 8))
    m_pad = _round_up(M, tm)
    if m_pad != M:
        x2d = jnp.pad(x2d, ((0, m_pad - M), (0, 0)))

    grid = (m_pad // tm,)

    out = pl.pallas_call(
        _ffn_kernel,
        out_shape=jax.ShapeDtypeStruct((m_pad, C_out), x.dtype),
        grid=grid,
        in_specs=[
            pl.BlockSpec((tm, C), lambda i: (i, 0)),        # streamed, double-buffered
            pl.BlockSpec((C_out, C), lambda i: (0, 0)),     # VMEM-resident weight
            pl.BlockSpec((1, C_out), lambda i: (0, 0)),     # VMEM-resident bias
        ],
        out_specs=pl.BlockSpec((tm, C_out), lambda i: (i, 0)),
        compiler_params=pltpu.CompilerParams(
            dimension_semantics=("parallel",),              # no cross-step carry
            vmem_limit_bytes=32 * 1024 * 1024,              # valid on v5e/v6e/v7x
        ),
    )(x2d, weight, b2d)

    return out[:M].reshape(B, T, C_out)


def init_params(key, n_embd):
    # Deterministic init mimicking nn.Linear default: U(-1/sqrt(fan_in), 1/sqrt(fan_in))
    kw, kb = jax.random.split(key)
    bound = 1.0 / jnp.sqrt(jnp.float32(n_embd))
    weight = jax.random.uniform(kw, (n_embd, n_embd), jnp.float32, -bound, bound)
    bias = jax.random.uniform(kb, (n_embd,), jnp.float32, -bound, bound)
    return weight, bias


if __name__ == "__main__":
    key = jax.random.PRNGKey(0)
    k_x, k_p = jax.random.split(key)

    B, T, C = 2, 8, n_embd
    x = jax.random.normal(k_x, (B, T, C), jnp.float32)
    weight, bias = init_params(k_p, n_embd)

    y = feed_forward(x, weight, bias)
    y = jax.block_until_ready(y)

    # Reference check (plain JAX) — same semantics as the PyTorch forward.
    y_ref = jnp.maximum(x @ weight.T + bias, 0.0)
    assert y.shape == (B, T, C)
    assert jnp.allclose(y, y_ref, atol=1e-5, rtol=1e-5)

    print("KERNEL_OK")
</pallas_src>

<mosaic_0001>
module attributes {stable_mosaic.version = 11 : i64} {
  func.func @_ffn_kernel(%arg0: i32, %arg1: memref<16x32xf32, #tpu.memory_space<vmem>>, %arg2: memref<32x32xf32, #tpu.memory_space<vmem>>, %arg3: memref<1x32xf32, #tpu.memory_space<vmem>>, %arg4: memref<16x32xf32, #tpu.memory_space<vmem>>) attributes {dimension_semantics = [#tpu.dimension_semantics<parallel>], iteration_bounds = array<i64: 1>, scalar_prefetch = 0 : i64, scratch_operands = 0 : i64, tpu.core_type = #tpu.core_type<tc>, window_params = [{transform_indices = @transform_0, window_bounds = array<i64: 16, 32>}, {pipeline_mode = #tpu.pipeline_mode<synchronous>, transform_indices = @transform_1, window_bounds = array<i64: 32, 32>}, {pipeline_mode = #tpu.pipeline_mode<synchronous>, transform_indices = @transform_2, window_bounds = array<i64: 1, 32>}, {transform_indices = @transform_3, window_bounds = array<i64: 16, 32>}]} {
    %c0 = arith.constant 0 : index
    %c0_0 = arith.constant 0 : index
    %0 = vector.load %arg1[%c0, %c0_0] : memref<16x32xf32, #tpu.memory_space<vmem>>, vector<16x32xf32>
    %c0_1 = arith.constant 0 : index
    %c0_2 = arith.constant 0 : index
    %1 = vector.load %arg2[%c0_1, %c0_2] : memref<32x32xf32, #tpu.memory_space<vmem>>, vector<32x32xf32>
    %cst = arith.constant dense<0.000000e+00> : vector<16x32xf32>
    %2 = tpu.matmul %0, %1, %cst {dimension_numbers = #tpu.dot_dimension_numbers<[1], [1], [0], [0], [0, 0, 1, 0], [], []>} : vector<16x32xf32>, vector<32x32xf32>, vector<16x32xf32> -> vector<16x32xf32>
    %c0_3 = arith.constant 0 : index
    %c0_4 = arith.constant 0 : index
    %3 = vector.load %arg3[%c0_3, %c0_4] : memref<1x32xf32, #tpu.memory_space<vmem>>, vector<1x32xf32>
    %4 = vector.broadcast %3 : vector<1x32xf32> to vector<16x32xf32>
    %5 = arith.addf %2, %4 : vector<16x32xf32>
    %cst_5 = arith.constant 0.000000e+00 : f32
    %6 = vector.broadcast %cst_5 : f32 to vector<16x32xf32>
    %7 = arith.maximumf %5, %6 : vector<16x32xf32>
    %c0_6 = arith.constant 0 : index
    %c0_7 = arith.constant 0 : index
    %8 = vector.load %arg4[%c0_6, %c0_7] : memref<16x32xf32, #tpu.memory_space<vmem>>, vector<16x32xf32>
    tpu.vector_store %arg4[%c0_6, %c0_7], %7 {strides = array<i32>} : memref<16x32xf32, #tpu.memory_space<vmem>>, vector<16x32xf32>,
    return
  }
  func.func @transform_0(%arg0: i32) -> (i32, i32) {
    %c0_i32 = arith.constant 0 : i32
    %c0_i32_0 = arith.constant 0 : i32
    return %arg0, %c0_i32 : i32, i32
  }
  func.func @transform_1(%arg0: i32) -> (i32, i32) {
    %c0_i32 = arith.constant 0 : i32
    %c0_i32_0 = arith.constant 0 : i32
    %c0_i32_1 = arith.constant 0 : i32
    return %c0_i32, %c0_i32_0 : i32, i32
  }
  func.func @transform_2(%arg0: i32) -> (i32, i32) {
    %c0_i32 = arith.constant 0 : i32
    %c0_i32_0 = arith.constant 0 : i32
    %c0_i32_1 = arith.constant 0 : i32
    return %c0_i32, %c0_i32_0 : i32, i32
  }
  func.func @transform_3(%arg0: i32) -> (i32, i32) {
    %c0_i32 = arith.constant 0 : i32
    %c0_i32_0 = arith.constant 0 : i32
    return %arg0, %c0_i32 : i32, i32
  }
}

</mosaic_0001>

<llo_original>
// kernel: tpu_custom_call.1
$region0: #{tpu_custom_call.1}
  #allocation0 [shape = 'u32[]', space=smem, size = 0x4, offset = 0x4, fixed_abs, tag = 'smem constant byte address 0x4 - core index']
  #allocation1 [shape = 'u32[72,128]{1,0:T(1,128)}', space=vmem, size = 0x9000, scoped, tag = 'internal scratch']
  %s0 = inlined_call_operand.hbm [shape: f32[16,32], index: 0, kind: input, shape index: {}]
  %s1 = inlined_call_operand.hbm [shape: f32[32,32], index: 1, kind: input, shape index: {}]
  %s2 = inlined_call_operand.vmem [shape: f32[1,32], index: 2, kind: input, shape index: {}]
  %s3 = inlined_call_operand.hbm [shape: f32[16,32], index: 3, kind: output, shape index: {}]
  %s4 = sld [smem:[#allocation0]]
  $region30: #{tpu_custom_call.1} parent=0
    _
  %s6 = ssub.s32 1, %s4
  %s7 = scalar_select 0, %s6, %s4
  $region1: #{tpu_custom_call.1} parent=0
    #allocation2 [shape = 'u8[8192]{0}', space=vmem, size = 0x2000, scoped, tag = 'input window, operand 0, single buffered']
    #allocation3 [shape = 's32[1]{0}', space=sflag, size = 0x4, scoped, tag = 'scoped memory for tpu_custom_call.1']
    #allocation4 [shape = 's32[1]{0}', space=sflag, size = 0x4, scoped, tag = 'scoped memory for tpu_custom_call.1']
    #allocation5 [shape = 'u8[16384]{0}', space=vmem, size = 0x4000, scoped, tag = 'input window, operand 1, single buffered']
    #allocation6 [shape = 's32[1]{0}', space=sflag, size = 0x4, scoped, tag = 'scoped memory for tpu_custom_call.1']
    #allocation7 [shape = 'u8[8192]{0}', space=vmem, size = 0x2000, scoped, tag = 'output window, operand 0, single buffered']
    %8 = vsyncpa [#allocation3], 0
    %9 = vsyncpa [#allocation6], 0
    %10 = vsyncpa [#allocation4], 0
    // Predicated region
    $region2: #{tpu_custom_call.1} parent=1 // pred_check
      _
    $region3: #{tpu_custom_call.1} parent=1 // pred_check_branch
      %12 = sbr.rel (0) target = $region5
    $region4: #{tpu_custom_call.1} parent=1 // pred_region
      %14 = vsyncadd [#allocation3], 0
      %s15 = sshll.u32 %s0, 4
      %s16 = int_to_ptr.hbm [resolvable:$true] %s15
      %s17 = sshll.u32 [#allocation2], 4
      %s18 = int_to_ptr.vmem [resolvable:$true] %s17
      %23 = dma.hbm_to_vmem [thread:$0]  %s16, 256, %s18, [#allocation3], 128, 128, 8
    $region5: #{tpu_custom_call.1} parent=1 // pred_fallthru
      _
    // Predicated region
    $region6: #{tpu_custom_call.1} parent=1 // pred_check
      _
    $region7: #{tpu_custom_call.1} parent=1 // pred_check_branch
      %25 = sbr.rel (0) target = $region9
    $region8: #{tpu_custom_call.1} parent=1 // pred_region
      %27 = vsyncadd [#allocation6], 0
      %s28 = sshll.u32 %s1, 4
      %s29 = int_to_ptr.hbm [resolvable:$true] %s28
      %s30 = sshll.u32 [#allocation5], 4
      %s31 = int_to_ptr.vmem [resolvable:$true] %s30
      %36 = dma.hbm_to_vmem [thread:$0]  %s29, 512, %s31, [#allocation6], 128, 128, 8
    $region9: #{tpu_custom_call.1} parent=1 // pred_fallthru
      _
    // Predicated region
    $region10: #{tpu_custom_call.1} parent=1 // pred_check
      _
    $region11: #{tpu_custom_call.1} parent=1 // pred_check_branch
      %38 = sbr.rel (0) target = $region13
    $region12: #{tpu_custom_call.1} parent=1 // pred_region
      _
    $region13: #{tpu_custom_call.1} parent=1 // pred_fallthru
      _
    // Predicated region
    $region14: #{tpu_custom_call.1} parent=1 // pred_check
      _
    $region15: #{tpu_custom_call.1} parent=1 // pred_check_branch
      %40 = sbr.rel (0) target = $region17
    $region16: #{tpu_custom_call.1} parent=1 // pred_region
      %42 = dma.done [#allocation3], 256
    $region17: #{tpu_custom_call.1} parent=1 // pred_fallthru
      _
    // Predicated region
    $region18: #{tpu_custom_call.1} parent=1 // pred_check
      _
    $region19: #{tpu_custom_call.1} parent=1 // pred_check_branch
      %44 = sbr.rel (0) target = $region21
    $region20: #{tpu_custom_call.1} parent=1 // pred_region
      %46 = dma.done [#allocation6], 512
    $region21: #{tpu_custom_call.1} parent=1 // pred_fallthru
      _
    %v47 = vld [vmem:[#allocation2] sm:$0xff]
    %v48 = vld [vmem:[#allocation2 + $0x8] sm:$0xff]
    %v49 = vld [vmem:[#allocation5] sm:$0xff]
    %v50 = vld [vmem:[#allocation5 + $0x8] sm:$0xff]
    %v51 = vld [vmem:[#allocation5 + $0x10] sm:$0xff]
    %v52 = vld [vmem:[#allocation5 + $0x18] sm:$0xff]
    %v53 = vld [vmem:[%s2] sm:$0x1]
    %v55 = vperm.slane %v53, 0
    %vm57 = vcmask 261120
    %v59 = vsel %vm57, %v47, 0
    %v62 = vsel %vm57, %v48, 0
    %v65 = vsel %vm57, %v49, 0
    %v68 = vsel %vm57, %v50, 0
    %v71 = vsel %vm57, %v51, 0
    %v74 = vsel %vm57, %v52, 0
    %76 = vmatpush.xpose.msra.mxu0 0.0
    %77 = vmatpush.xpose.msra.mxu0 0.0
    %78 = vmatpush.xpose.msra.mxu0 0.0
    %79 = vmatpush.xpose.msra.mxu0 0.0
    %80 = vmatpush.xpose.msra.mxu0 0.0
    %81 = vmatpush.xpose.msra.mxu0 0.0
    %82 = vmatpush.xpose.msra.mxu0 0.0
    %83 = vmatpush.xpose.msra.mxu0 0.0
    %84 = vmatpush.xpose.msra.mxu0 0.0
    %85 = vmatpush.xpose.msra.mxu0 0.0
    %86 = vmatpush.xpose.msra.mxu0 0.0
    %87 = vmatpush.xpose.msra.mxu0 0.0
    %88 = vmatpush.xpose.msra.mxu0 %v74
    %89 = vmatpush.xpose.msra.mxu0 %v71
    %90 = vmatpush.xpose.msra.mxu0 %v68
    %91 = vmatpush.xpose.msra.mxu0 %v65
    %92 = vmatmul.f32.gmra.mxu0 %v59
    %v93 = vpop.f32.mrf.mxu0
    %v94 = vadd.f32 %v55, %v93
    %95 = vmatmul.f32.gmra.mxu0 %v62
    %v96 = vpop.f32.mrf.mxu0
    %v97 = vadd.f32 %v55, %v96
    %98 = vdwg.mxu0
    %v99 = vmax.f32 %v94, 0.0
    %v100 = vmax.f32 %v97, 0.0
    %101 = vst.msk [vmem:[#allocation7] sm:$0xff] %vm57, %v99
    %102 = vst.msk [vmem:[#allocation7 + $0x8] sm:$0xff] %vm57, %v100
    // Predicated region
    $region22: #{tpu_custom_call.1} parent=1 // pred_check
      _
    $region23: #{tpu_custom_call.1} parent=1 // pred_check_branch
      %104 = sbr.rel (0) target = $region25
    $region24: #{tpu_custom_call.1} parent=1 // pred_region
      %106 = vsyncadd [#allocation4], 0
      %s107 = sshll.u32 [#allocation7], 4
      %s108 = int_to_ptr.vmem [resolvable:$true] %s107
      %s109 = sshll.u32 %s3, 4
      %s110 = int_to_ptr.hbm [resolvable:$true] %s109
      %115 = dma.vmem_to_hbm [thread:$0]  %s108, 256, %s110, [#allocation4], 128, 128, 8
    $region25: #{tpu_custom_call.1} parent=1 // pred_fallthru
      _
    // Predicated region
    $region26: #{tpu_custom_call.1} parent=1 // pred_check
      _
    $region27: #{tpu_custom_call.1} parent=1 // pred_check_branch
      %117 = sbr.rel (0) target = $region29
    $region28: #{tpu_custom_call.1} parent=1 // pred_region
      %119 = dma.done [#allocation4], 256
    $region29: #{tpu_custom_call.1} parent=1 // pred_fallthru
      _
    %120 = vsyncpa [#allocation3], 1
    %121 = vsyncpa [#allocation6], 1
    %122 = vsyncpa [#allocation4], 1

</llo_original>
